<compile_context>
chip_gen: v7x
topology: tpu7x:2x2x1
jax: 0.10.0
libtpu: 0.0.40
codegen_flags: <defaults>
</compile_context>

<pallas_src>
import functools

import jax
import jax.numpy as jnp
from jax import lax
from jax.experimental import pallas as pl
from jax.experimental.pallas import tpu as pltpu

NUM_CLASSES = 5
EPS = 0.0

_F32 = 4
_LANE = 128
_SUB = 8
_CHUNK_BYTES = 2 * 1024 * 1024     # cap on the live layer-1 activation


def _round_up(v, m):
    return (v + m - 1) // m * m


def _vmem_budget():
    """Generation-aware (scoped-VMEM limit, tile budget) in bytes."""
    phys = None
    try:
        phys = getattr(pltpu.get_tpu_info(), "vmem_capacity_bytes", None)
    except Exception:
        phys = None
    if not phys:
        phys = 64 * 1024 * 1024                     # conservative: v7x per-core VMEM
    limit = min(phys * 3 // 4, 100 * 1024 * 1024)   # 96 MiB on v5e/v6e, 48 MiB on v7x
    return int(limit), int(limit) - 4 * 1024 * 1024


def _pick_sb(tb, n, lp):
    """Images per inner matmul chunk; bounds the live (rows, LP) activation."""
    if tb * n * lp * _F32 <= _CHUNK_BYTES:
        return tb
    sb = max(_SUB, (_CHUNK_BYTES // (n * lp * _F32)) // _SUB * _SUB)
    sb = min(sb, tb)
    while sb > _SUB and tb % sb:
        sb -= _SUB
    return sb if tb % sb == 0 else tb


def _vmem_bytes(tb, n, cin, lp, cp, sb):
    """(8,128)-tiling-aware per-grid-step VMEM footprint."""
    lane = lambda v: _round_up(v, _LANE)
    sub = lambda v: _round_up(v, _SUB)
    x_tile = sub(tb * n) * lane(cin) * _F32       # Cin lanes pad to 128: modeled honestly
    out_tile = sub(tb) * lane(3 * cp) * _F32
    weights = (sub(cin) * lane(lp) + sub(1) * lane(lp)
               + sub(lp) * lane(cp) + sub(1) * lane(cp)) * _F32
    h_live = sub(sb * n) * lane(lp) * _F32        # chunked layer-1 activation
    latent = sub(tb) * lane(lp) * _F32
    head = 4 * sub(tb) * lane(cp) * _F32
    # x / out tiles are double-buffered by the pipeline; weights ~single-buffered.
    return 2 * (x_tile + out_tile) + weights + h_live + latent + head


def _auto_tile(B, n, cin, lp, cp, budget):
    if B <= _SUB:
        return B
    tb = (B // _SUB) * _SUB
    if B >= 16:
        # guarantee >= 2 grid steps: pipeline overlap + keeps both v7x cores busy
        tb = min(tb, max(_SUB, (B // 2) // _SUB * _SUB))
    tb = min(tb, 1024)
    while tb > _SUB and _vmem_bytes(tb, n, cin, lp, cp, _pick_sb(tb, n, lp)) > budget:
        tb = max(_SUB, (tb // 2) // _SUB * _SUB)
    while tb > _SUB and B % tb != 0:              # prefer tiles that divide B
        tb -= _SUB
    return tb


def _const_spec(shape):
    """Grid-invariant operand: resident, single-buffered when supported."""
    index_map = lambda i: (0,) * len(shape)
    try:
        return pl.BlockSpec(shape, index_map,
                            pipeline_mode=pl.Buffered(buffer_count=1))
    except Exception:
        return pl.BlockSpec(shape, index_map)


def _evidential_kernel(n_points, sb, c_true,
                       x_ref, w1_ref, b1_ref, w2_ref, b2_ref,
                       out_ref, latent_ref):
    # x_ref : (tb*N, Cin) flattened points    w1: (Cin, LP)   b1: (1, LP)
    # w2    : (LP, CP)                        b2: (1, CP)
    # out   : (tb, 3*CP) = [evidence | concentration | expected_probability]
    # latent_ref : (tb, LP) scratch
    tb = out_ref.shape[0]
    lp = w1_ref.shape[1]
    cp = w2_ref.shape[1]
    n_chunks = tb // sb
    chunk_rows = sb * n_points

    w1 = w1_ref[...]
    b1 = b1_ref[...]

    def encode_chunk(s, carry):
        r0 = s * chunk_rows
        if chunk_rows % _SUB == 0:
            r0 = pl.multiple_of(r0, _SUB)
        xs = x_ref[pl.ds(r0, chunk_rows), :]                       # (sb*N, Cin)
        # ONE (sb*N, Cin) x (Cin, LP) MXU matmul: no per-image batched matmuls,
        # no broadcast copies of w1.
        hs = jnp.dot(xs, w1, preferred_element_type=jnp.float32)
        hs = jnp.maximum(hs + b1, 0.0)                             # (sb*N, LP)
        # Fused max-pool over points; the reshape only splits the sublane-major
        # dim at 8-aligned boundaries (N % 8 == 0), so it is layout-preserving.
        latent_ref[pl.ds(s * sb, sb), :] = jnp.max(
            hs.reshape(sb, n_points, lp), axis=1)
        return carry

    lax.fori_loop(0, n_chunks, encode_chunk, 0, unroll=n_chunks <= 4)

    # final_layer: Linear + ReLU (evidence). Padded class lanes stay exactly 0.
    latent = latent_ref[...]                                        # (tb, LP)
    logits = jnp.dot(latent, w2_ref[...],
                     preferred_element_type=jnp.float32) + b2_ref[...]
    evidence = jnp.maximum(logits, 0.0)                             # (tb, CP)

    # ---- evidential head ----
    concentration = evidence + 1.0
    # Padded lanes hold exact zeros, so the full-lane sum of evidence plus the
    # TRUE class count C reproduces S = sum(concentration[:, :C]).
    s_sum = jnp.sum(evidence, axis=-1, keepdims=True) + jnp.float32(c_true)
    inv_s = pl.reciprocal(s_sum, approx=False)       # exact; approx=True ~1e-3
    prob = concentration * inv_s

    # Lane-dense, per-batch-contiguous output slab: three aligned 128-lane-wide
    # stores, one contiguous HBM region per grid step.
    out_ref[:, 0 * cp:1 * cp] = evidence
    out_ref[:, 1 * cp:2 * cp] = concentration
    out_ref[:, 2 * cp:3 * cp] = prob


def evidential_particle_classifier(x, w1, b1, w2, b2, *,
                                   num_classes=NUM_CLASSES, eps=EPS, tb=None):
    """x: (B, N, Cin) f32. Returns (evidence, uncertainty, concentration,
    expected_probability), matching EvidentialParticleClassifier.forward."""
    B, N, Cin = x.shape
    L = w1.shape[1]
    C = w2.shape[1]
    lp = _round_up(L, _LANE)
    cp = _round_up(C, _LANE)
    f32 = jnp.float32

    # Flatten (B, N, Cin) -> (B*N, Cin): free reshape, turns layer 1 into one
    # 2-D matmul per chunk.  (Cin still pads to 128 lanes inside VMEM; that
    # cost is accounted for in _vmem_bytes rather than ignored.)
    x_flat = x.astype(f32).reshape(B * N, Cin)

    # Zero-pad latent / class dims to full 128-lane width (numerically exact:
    # padded rows/cols contribute exact zeros everywhere downstream).
    w1p = jnp.zeros((Cin, lp), f32).at[:, :L].set(w1.astype(f32))
    b1p = jnp.zeros((1, lp), f32).at[:, :L].set(jnp.reshape(b1, (1, L)).astype(f32))
    w2p = jnp.zeros((lp, cp), f32).at[:L, :C].set(w2.astype(f32))
    b2p = jnp.zeros((1, cp), f32).at[:, :C].set(jnp.reshape(b2, (1, C)).astype(f32))

    vmem_limit, budget = _vmem_budget()
    if tb is None:
        tb = _auto_tile(B, N, Cin, lp, cp, budget)
    tb = min(tb, B)
    sb = _pick_sb(tb, N, lp)
    grid = (pl.cdiv(B, tb),)

    flops = 2 * B * N * Cin * lp + 2 * B * lp * cp
    bytes_accessed = _F32 * (B * N * Cin + Cin * lp + lp + lp * cp + cp
                             + B * 3 * cp)

    slab = pl.pallas_call(
        functools.partial(_evidential_kernel, N, sb, C),
        out_shape=jax.ShapeDtypeStruct((B, 3 * cp), f32),
        grid=grid,
        in_specs=[
            pl.BlockSpec((tb * N, Cin), lambda i: (i, 0)),   # streamed x tile
            _const_spec((Cin, lp)),                          # w1 (resident)
            _const_spec((1, lp)),                            # b1
            _const_spec((lp, cp)),                           # w2
            _const_spec((1, cp)),                            # b2
        ],
        out_specs=pl.BlockSpec((tb, 3 * cp), lambda i: (i, 0)),
        scratch_shapes=[pltpu.VMEM((tb, lp), f32)],
        compiler_params=pltpu.CompilerParams(
            dimension_semantics=("parallel",),
            vmem_limit_bytes=vmem_limit,
        ),
        cost_estimate=pl.CostEstimate(flops=flops, transcendentals=0,
                                      bytes_accessed=bytes_accessed),
    )(x_flat, w1p, b1p, w2p, b2p)

    evidence = slab[:, 0 * cp:0 * cp + C]
    concentration = slab[:, 1 * cp:1 * cp + C]
    expected_probability = slab[:, 2 * cp:2 * cp + C]
    # Uncertainty is one tiny reduction over (B, C): trivial wrapper math,
    # saving a full broadcast (B, 128) output plane + store stream in-kernel.
    S = jnp.sum(concentration, axis=1, keepdims=True)
    uncertainty = num_classes / (S + eps)
    return evidence, uncertainty, concentration, expected_probability


def _reference(x, w1, b1, w2, b2, num_classes=NUM_CLASSES, eps=EPS):
    hi = jax.lax.Precision.HIGHEST   # pin the XLA reference to f32-accurate dots
    h = jnp.maximum(jnp.einsum('bnc,cl->bnl', x, w1, precision=hi) + b1[None], 0.0)
    latent = jnp.max(h, axis=1)
    evidence = jnp.maximum(jnp.dot(latent, w2, precision=hi) + b2, 0.0)
    conc = evidence + 1.0
    S = jnp.sum(conc, axis=1, keepdims=True)
    return evidence, num_classes / (S + eps), conc, conc / S


if __name__ == "__main__":
    key = jax.random.PRNGKey(0)
    B, N, Cin, LATENT = 16, 64, 4, 32

    k_x, k_w1, k_b1, k_w2, k_b2 = jax.random.split(key, 5)
    x = jax.random.normal(k_x, (B, N, Cin), dtype=jnp.float32)

    # PyTorch nn.Linear-style init (uniform +-1/sqrt(fan_in)); weights [in,out].
    lim1 = 1.0 / jnp.sqrt(jnp.float32(Cin))
    w1 = jax.random.uniform(k_w1, (Cin, LATENT), jnp.float32, -lim1, lim1)
    b1 = jax.random.uniform(k_b1, (1, LATENT), jnp.float32, -lim1, lim1)
    lim2 = 1.0 / jnp.sqrt(jnp.float32(LATENT))
    w2 = jax.random.uniform(k_w2, (LATENT, NUM_CLASSES), jnp.float32, -lim2, lim2)
    b2 = jax.random.uniform(k_b2, (1, NUM_CLASSES), jnp.float32, -lim2, lim2)

    # auto tiling: B=16 -> tb=8, grid=(2,): exercises the pipelined batch axis.
    outs = evidential_particle_classifier(x, w1, b1, w2, b2)
    outs = jax.block_until_ready(outs)

    refs = _reference(x, w1, b1, w2, b2)
    names = ["evidence", "uncertainty", "concentration", "expected_probability"]
    for name, got, want in zip(names, outs, refs):
        assert got.shape == want.shape, (name, got.shape, want.shape)
        assert jnp.allclose(got, want, atol=1e-4, rtol=1e-4), name

    print("KERNEL_OK")
</pallas_src>

<mosaic_0001>
module attributes {stable_mosaic.version = 11 : i64} {
  func.func @_evidential_kernel(%arg0: i32, %arg1: memref<512x4xf32, #tpu.memory_space<vmem>>, %arg2: memref<4x128xf32, #tpu.memory_space<vmem>>, %arg3: memref<1x128xf32, #tpu.memory_space<vmem>>, %arg4: memref<128x128xf32, #tpu.memory_space<vmem>>, %arg5: memref<1x128xf32, #tpu.memory_space<vmem>>, %arg6: memref<8x384xf32, #tpu.memory_space<vmem>>, %arg7: memref<8x128xf32, #tpu.memory_space<vmem>>) attributes {dimension_semantics = [#tpu.dimension_semantics<parallel>], iteration_bounds = array<i64: 2>, scalar_prefetch = 0 : i64, scratch_operands = 1 : i64, tpu.core_type = #tpu.core_type<tc>, window_params = [{transform_indices = @transform_0, window_bounds = array<i64: 512, 4>}, {pipeline_mode = #tpu.pipeline_mode<synchronous>, transform_indices = @transform_1, window_bounds = array<i64: 4, 128>}, {pipeline_mode = #tpu.pipeline_mode<synchronous>, transform_indices = @transform_2, window_bounds = array<i64: 1, 128>}, {pipeline_mode = #tpu.pipeline_mode<synchronous>, transform_indices = @transform_3, window_bounds = array<i64: 128, 128>}, {pipeline_mode = #tpu.pipeline_mode<synchronous>, transform_indices = @transform_4, window_bounds = array<i64: 1, 128>}, {transform_indices = @transform_5, window_bounds = array<i64: 8, 384>}]} {
    %c0 = arith.constant 0 : index
    %c0_0 = arith.constant 0 : index
    %0 = vector.load %arg2[%c0, %c0_0] : memref<4x128xf32, #tpu.memory_space<vmem>>, vector<4x128xf32>
    %c0_1 = arith.constant 0 : index
    %c0_2 = arith.constant 0 : index
    %1 = vector.load %arg3[%c0_1, %c0_2] : memref<1x128xf32, #tpu.memory_space<vmem>>, vector<1x128xf32>
    %c0_i32 = arith.constant 0 : i32
    %c512_i32 = arith.constant 512 : i32
    %2 = arith.muli %c0_i32, %c512_i32 : i32
    %3 = tpu.assume_multiple %2, 8 : i32
    %4 = arith.index_cast %3 : i32 to index
    %c0_3 = arith.constant 0 : index
    %5 = vector.load %arg1[%4, %c0_3] : memref<512x4xf32, #tpu.memory_space<vmem>>, vector<512x4xf32>
    %cst = arith.constant dense<0.000000e+00> : vector<512x128xf32>
    %6 = tpu.matmul %5, %0, %cst {dimension_numbers = #tpu.dot_dimension_numbers<[1], [0], [0], [1], [0, 0, 1, 1], [], []>} : vector<512x4xf32>, vector<4x128xf32>, vector<512x128xf32> -> vector<512x128xf32>
    %7 = vector.broadcast %1 : vector<1x128xf32> to vector<512x128xf32>
    %8 = arith.addf %6, %7 : vector<512x128xf32>
    %cst_4 = arith.constant 0.000000e+00 : f32
    %9 = vector.broadcast %cst_4 : f32 to vector<512x128xf32>
    %10 = arith.maximumf %8, %9 : vector<512x128xf32>
    %11 = vector.shape_cast %10 : vector<512x128xf32> to vector<8x64x128xf32>
    %cst_5 = arith.constant dense<0xFF800000> : vector<8x128xf32>
    %12 = vector.multi_reduction <maximumf>, %11, %cst_5 [1] : vector<8x64x128xf32> to vector<8x128xf32>
    %c8_i32 = arith.constant 8 : i32
    %13 = arith.muli %c0_i32, %c8_i32 : i32
    %14 = arith.index_cast %13 : i32 to index
    %c0_6 = arith.constant 0 : index
    %15 = vector.load %arg7[%14, %c0_6] : memref<8x128xf32, #tpu.memory_space<vmem>>, vector<8x128xf32>
    tpu.vector_store %arg7[%14, %c0_6], %12 {strides = array<i32>} : memref<8x128xf32, #tpu.memory_space<vmem>>, vector<8x128xf32>,
    %c1_i32 = arith.constant 1 : i32
    %c0_7 = arith.constant 0 : index
    %c0_8 = arith.constant 0 : index
    %16 = vector.load %arg7[%c0_7, %c0_8] : memref<8x128xf32, #tpu.memory_space<vmem>>, vector<8x128xf32>
    %c0_9 = arith.constant 0 : index
    %c0_10 = arith.constant 0 : index
    %17 = vector.load %arg4[%c0_9, %c0_10] : memref<128x128xf32, #tpu.memory_space<vmem>>, vector<128x128xf32>
    %cst_11 = arith.constant dense<0.000000e+00> : vector<8x128xf32>
    %18 = tpu.matmul %16, %17, %cst_11 {dimension_numbers = #tpu.dot_dimension_numbers<[1], [0], [0], [1], [0, 0, 1, 1], [], []>} : vector<8x128xf32>, vector<128x128xf32>, vector<8x128xf32> -> vector<8x128xf32>
    %c0_12 = arith.constant 0 : index
    %c0_13 = arith.constant 0 : index
    %19 = vector.load %arg5[%c0_12, %c0_13] : memref<1x128xf32, #tpu.memory_space<vmem>>, vector<1x128xf32>
    %20 = vector.broadcast %19 : vector<1x128xf32> to vector<8x128xf32>
    %21 = arith.addf %18, %20 : vector<8x128xf32>
    %cst_14 = arith.constant 0.000000e+00 : f32
    %22 = vector.broadcast %cst_14 : f32 to vector<8x128xf32>
    %23 = arith.maximumf %21, %22 : vector<8x128xf32>
    %cst_15 = arith.constant 1.000000e+00 : f32
    %24 = vector.broadcast %cst_15 : f32 to vector<8x128xf32>
    %25 = arith.addf %23, %24 : vector<8x128xf32>
    %cst_16 = arith.constant dense<0.000000e+00> : vector<8xf32>
    %26 = vector.multi_reduction <add>, %23, %cst_16 [1] : vector<8x128xf32> to vector<8xf32>
    %27 = vector.shape_cast %26 : vector<8xf32> to vector<8x1xf32>
    %cst_17 = arith.constant 5.000000e+00 : f32
    %28 = vector.broadcast %cst_17 : f32 to vector<8x1xf32>
    %29 = arith.addf %27, %28 : vector<8x1xf32>
    %30 = tpu.reciprocal %29 : vector<8x1xf32> -> vector<8x1xf32>
    %31 = vector.broadcast %30 : vector<8x1xf32> to vector<8x128xf32>
    %32 = arith.mulf %25, %31 : vector<8x128xf32>
    %c0_18 = arith.constant 0 : index
    %c0_19 = arith.constant 0 : index
    %33 = vector.load %arg6[%c0_18, %c0_19] : memref<8x384xf32, #tpu.memory_space<vmem>>, vector<8x128xf32>
    tpu.vector_store %arg6[%c0_18, %c0_19], %23 {strides = array<i32>} : memref<8x384xf32, #tpu.memory_space<vmem>>, vector<8x128xf32>,
    %c0_20 = arith.constant 0 : index
    %c128 = arith.constant 128 : index
    %34 = vector.load %arg6[%c0_20, %c128] : memref<8x384xf32, #tpu.memory_space<vmem>>, vector<8x128xf32>
    tpu.vector_store %arg6[%c0_20, %c128], %25 {strides = array<i32>} : memref<8x384xf32, #tpu.memory_space<vmem>>, vector<8x128xf32>,
    %c0_21 = arith.constant 0 : index
    %c256 = arith.constant 256 : index
    %35 = vector.load %arg6[%c0_21, %c256] : memref<8x384xf32, #tpu.memory_space<vmem>>, vector<8x128xf32>
    tpu.vector_store %arg6[%c0_21, %c256], %32 {strides = array<i32>} : memref<8x384xf32, #tpu.memory_space<vmem>>, vector<8x128xf32>,
    return
  }
  func.func @transform_0(%arg0: i32) -> (i32, i32) {
    %c0_i32 = arith.constant 0 : i32
    %c0_i32_0 = arith.constant 0 : i32
    return %arg0, %c0_i32 : i32, i32
  }
  func.func @transform_1(%arg0: i32) -> (i32, i32) {
    %c0_i32 = arith.constant 0 : i32
    %c0_i32_0 = arith.constant 0 : i32
    %c0_i32_1 = arith.constant 0 : i32
    return %c0_i32, %c0_i32_0 : i32, i32
  }
  func.func @transform_2(%arg0: i32) -> (i32, i32) {
    %c0_i32 = arith.constant 0 : i32
    %c0_i32_0 = arith.constant 0 : i32
    %c0_i32_1 = arith.constant 0 : i32
    return %c0_i32, %c0_i32_0 : i32, i32
  }
  func.func @transform_3(%arg0: i32) -> (i32, i32) {
    %c0_i32 = arith.constant 0 : i32
    %c0_i32_0 = arith.constant 0 : i32
    %c0_i32_1 = arith.constant 0 : i32
    return %c0_i32, %c0_i32_0 : i32, i32
  }
  func.func @transform_4(%arg0: i32) -> (i32, i32) {
    %c0_i32 = arith.constant 0 : i32
    %c0_i32_0 = arith.constant 0 : i32
    %c0_i32_1 = arith.constant 0 : i32
    return %c0_i32, %c0_i32_0 : i32, i32
  }
  func.func @transform_5(%arg0: i32) -> (i32, i32) {
    %c0_i32 = arith.constant 0 : i32
    %c0_i32_0 = arith.constant 0 : i32
    return %arg0, %c0_i32 : i32, i32
  }
}

</mosaic_0001>

<llo_original>
// kernel: tpu_custom_call.1
$region0: #{tpu_custom_call.1}
  #allocation0 [shape = 'u32[]', space=smem, size = 0x4, offset = 0x4, fixed_abs, tag = 'smem constant byte address 0x4 - core index']
  #allocation1 [shape = 'u32[144,128]{1,0:T(1,128)}', space=vmem, size = 0x12000, scoped, tag = 'internal scratch']
  #allocation2 [shape = 'f32[8,128]{1,0:T(8,128)}', space=vmem, size = 0x1000, scoped, tag = 'scratch operand']
  %s0 = inlined_call_operand.vmem [shape: f32[1024,4], index: 0, kind: input, shape index: {}]
  %s1 = inlined_call_operand.vmem [shape: f32[4,128], index: 1, kind: input, shape index: {}]
  %s2 = inlined_call_operand.vmem [shape: f32[1,128], index: 2, kind: input, shape index: {}]
  %s3 = inlined_call_operand.vmem [shape: f32[128,128], index: 3, kind: input, shape index: {}]
  %s4 = inlined_call_operand.vmem [shape: f32[1,128], index: 4, kind: input, shape index: {}]
  %s5 = inlined_call_operand.hbm [shape: f32[16,384], index: 5, kind: output, shape index: {}]
  %s6 = sld [smem:[#allocation0]]
  $region53: #{tpu_custom_call.1} parent=0
    _
  %s8 = ssub.s32 1, %s6
  %s9 = scalar_select 0, %s8, %s6
  $region1: #{tpu_custom_call.1} parent=0
    #allocation3 [shape = 'u8[24576]{0}', space=vmem, size = 0x6000, scoped, tag = 'output window, operand 0']
    #allocation4 [shape = 's32[2]{0}', space=sflag, size = 0x8, scoped, tag = 'scoped memory for tpu_custom_call.1']
    %10 = vsyncpa [#allocation4], 0
    %s11 = scalar_lea.sflag [#allocation4], 1
    %12 = vsyncpa %s11, 0
    loop: start=0, step=1, limit=4
    $region2: #{tpu_custom_call.1} parent=1 // loop_pre_header
      _
    $region3: #{tpu_custom_call.1} parent=1 // loop_header
      %s14 = sphi 0, %s18
      %p15 = scmp.ge.s32.totalorder %s14, 4
      %s24 = sphi 0, %s26
      %s27 = sphi 0, %s24
      %s28 = sphi 0, %s27
      %s44 = sphi 0, %s28
      %s48 = sphi 0, %s48
      %s50 = sphi 0, %s48
      %s51 = sphi 0, %s50
      %s65 = sphi 0, %s51
      %s69 = sphi 0, %s69
      %s71 = sphi 0, %s69
      %s72 = sphi 0, %s71
      %s86 = sphi 0, %s72
      %s90 = sphi 0, %s90
      %s92 = sphi 0, %s90
      %s93 = sphi 0, %s92
      %s107 = sphi 0, %s93
      %s111 = sphi 0, %s111
      %s113 = sphi 0, %s111
      %s114 = sphi 0, %s113
      %s128 = sphi 0, %s114
      %s134 = sphi 0, %s136
      %s137 = sphi 0, %s134
      %s138 = sphi 0, %s137
      %s154 = sphi 0, %s138
    $region4: #{tpu_custom_call.1} parent=1 // loop_header_branch
      %17 = sbr.rel (%p15) target = $region8
    $region5: #{tpu_custom_call.1} parent=1 // loop_body
      %s19 = ssub.s32 %s14, 1
      %s20 = ssub.s32 %s14, 2
      %s21 = sadd.s32 %s14, 1
      %s22 = ssub.s32 %s14, %s21
      %p23 = scmp.eq.s32.totalorder %s22, 0
      %s25 = sadd.s32 %s24, 1
      %s26 = scalar_select %p23, %s24, %s25
      %p29 = pneg %p23
      %p30 = scmp.eq.s32.totalorder %s14, 1
      %p31 = por %p29, %p30
      %p32 = scmp.ne.s32.totalorder %s24, %s27
      %p33 = scmp.eq.s32.totalorder %s14, 0
      %p34 = por %p32, %p33
      %p35 = scmp.ne.s32.totalorder %s24, %s27
      %p36 = scmp.eq.s32.totalorder %s19, 1
      %p37 = por %p35, %p36
      %p38 = scmp.ne.s32.totalorder %s27, %s28
      %p39 = scmp.eq.s32.totalorder %s19, 0
      %p40 = por %p38, %p39
      %p41 = scmp.ne.s32.totalorder %s27, %s28
      %p42 = scmp.eq.s32.totalorder %s20, 1
      %p43 = por %p41, %p42
      %p45 = scmp.ne.s32.totalorder %s28, %s44
      %p46 = scmp.eq.s32.totalorder %s20, 0
      %p47 = por %p45, %p46
      %s49 = sadd.s32 %s48, 1
      %p52 = scmp.eq.s32.totalorder %s14, 1
      %p53 = scmp.ne.s32.totalorder %s48, %s50
      %p54 = scmp.eq.s32.totalorder %s14, 0
      %p55 = por %p53, %p54
      %p56 = scmp.ne.s32.totalorder %s48, %s50
      %p57 = scmp.eq.s32.totalorder %s19, 1
      %p58 = por %p56, %p57
      %p59 = scmp.ne.s32.totalorder %s50, %s51
      %p60 = scmp.eq.s32.totalorder %s19, 0
      %p61 = por %p59, %p60
      %p62 = scmp.ne.s32.totalorder %s50, %s51
      %p63 = scmp.eq.s32.totalorder %s20, 1
      %p64 = por %p62, %p63
      %p66 = scmp.ne.s32.totalorder %s51, %s65
      %p67 = scmp.eq.s32.totalorder %s20, 0
      %p68 = por %p66, %p67
      %s70 = sadd.s32 %s69, 1
      %p73 = scmp.eq.s32.totalorder %s14, 1
      %p74 = scmp.ne.s32.totalorder %s69, %s71
      %p75 = scmp.eq.s32.totalorder %s14, 0
      %p76 = por %p74, %p75
      %p77 = scmp.ne.s32.totalorder %s69, %s71
      %p78 = scmp.eq.s32.totalorder %s19, 1
      %p79 = por %p77, %p78
      %p80 = scmp.ne.s32.totalorder %s71, %s72
      %p81 = scmp.eq.s32.totalorder %s19, 0
      %p82 = por %p80, %p81
      %p83 = scmp.ne.s32.totalorder %s71, %s72
      %p84 = scmp.eq.s32.totalorder %s20, 1
      %p85 = por %p83, %p84
      %p87 = scmp.ne.s32.totalorder %s72, %s86
      %p88 = scmp.eq.s32.totalorder %s20, 0
      %p89 = por %p87, %p88
      %s91 = sadd.s32 %s90, 1
      %p94 = scmp.eq.s32.totalorder %s14, 1
      %p95 = scmp.ne.s32.totalorder %s90, %s92
      %p96 = scmp.eq.s32.totalorder %s14, 0
      %p97 = por %p95, %p96
      %p98 = scmp.ne.s32.totalorder %s90, %s92
      %p99 = scmp.eq.s32.totalorder %s19, 1
      %p100 = por %p98, %p99
      %p101 = scmp.ne.s32.totalorder %s92, %s93
      %p102 = scmp.eq.s32.totalorder %s19, 0
      %p103 = por %p101, %p102
      %p104 = scmp.ne.s32.totalorder %s92, %s93
      %p105 = scmp.eq.s32.totalorder %s20, 1
      %p106 = por %p104, %p105
      %p108 = scmp.ne.s32.totalorder %s93, %s107
      %p109 = scmp.eq.s32.totalorder %s20, 0
      %p110 = por %p108, %p109
      %s112 = sadd.s32 %s111, 1
      %p115 = scmp.eq.s32.totalorder %s14, 1
      %p116 = scmp.ne.s32.totalorder %s111, %s113
      %p117 = scmp.eq.s32.totalorder %s14, 0
      %p118 = por %p116, %p117
      %p119 = scmp.ne.s32.totalorder %s111, %s113
      %p120 = scmp.eq.s32.totalorder %s19, 1
      %p121 = por %p119, %p120
      %p122 = scmp.ne.s32.totalorder %s113, %s114
      %p123 = scmp.eq.s32.totalorder %s19, 0
      %p124 = por %p122, %p123
      %p125 = scmp.ne.s32.totalorder %s113, %s114
      %p126 = scmp.eq.s32.totalorder %s20, 1
      %p127 = por %p125, %p126
      %p129 = scmp.ne.s32.totalorder %s114, %s128
      %p130 = scmp.eq.s32.totalorder %s20, 0
      %p131 = por %p129, %p130
      %s132 = ssub.s32 %s14, %s21
      %p133 = scmp.eq.s32.totalorder %s132, 0
      %s135 = sadd.s32 %s134, 1
      %s136 = scalar_select %p133, %s134, %s135
      %p139 = pneg %p133
      %p140 = scmp.eq.s32.totalorder %s14, 1
      %p141 = por %p139, %p140
      %p142 = scmp.ne.s32.totalorder %s134, %s137
      %p143 = scmp.eq.s32.totalorder %s14, 0
      %p144 = por %p142, %p143
      %p145 = scmp.ne.s32.totalorder %s134, %s137
      %p146 = scmp.eq.s32.totalorder %s19, 1
      %p147 = por %p145, %p146
      %p148 = scmp.ne.s32.totalorder %s137, %s138
      %p149 = scmp.eq.s32.totalorder %s19, 0
      %p150 = por %p148, %p149
      %p151 = scmp.ne.s32.totalorder %s137, %s138
      %p152 = scmp.eq.s32.totalorder %s20, 1
      %p153 = por %p151, %p152
      %p155 = scmp.ne.s32.totalorder %s138, %s154
      %p156 = scmp.eq.s32.totalorder %s20, 0
      %p157 = por %p155, %p156
      %p158 = scmp.le.s32.totalorder 1, %s14
      %p159 = scmp.lt.s32.totalorder %s14, 3
      %p160 = pnand %p158, %p159
      %p161 = pneg %p160
      // Predicated region
      $region9: #{tpu_custom_call.1} parent=5 // pred_check
        _
      $region10: #{tpu_custom_call.1} parent=5 // pred_check_branch
        %163 = sbr.rel (%p160) target = $region12
      $region11: #{tpu_custom_call.1} parent=5 // pred_region
        %s164 = ssub.s32 %s14, 1
        // Predicated region
        $region13: #{tpu_custom_call.1} parent=11 // pred_check
          %p165 = pneg %p61
        $region14: #{tpu_custom_call.1} parent=11 // pred_check_branch
          %167 = sbr.rel (%p165) target = $region16
        $region15: #{tpu_custom_call.1} parent=11 // pred_region
          _
        $region16: #{tpu_custom_call.1} parent=11 // pred_fallthru
          _
        // Predicated region
        $region17: #{tpu_custom_call.1} parent=11 // pred_check
          %p168 = pneg %p82
        $region18: #{tpu_custom_call.1} parent=11 // pred_check_branch
          %170 = sbr.rel (%p168) target = $region20
        $region19: #{tpu_custom_call.1} parent=11 // pred_region
          _
        $region20: #{tpu_custom_call.1} parent=11 // pred_fallthru
          _
        // Predicated region
        $region21: #{tpu_custom_call.1} parent=11 // pred_check
          %p171 = pneg %p103
        $region22: #{tpu_custom_call.1} parent=11 // pred_check_branch
          %173 = sbr.rel (%p171) target = $region24
        $region23: #{tpu_custom_call.1} parent=11 // pred_region
          _
        $region24: #{tpu_custom_call.1} parent=11 // pred_fallthru
          _
        // Predicated region
        $region25: #{tpu_custom_call.1} parent=11 // pred_check
          %p174 = pneg %p124
        $region26: #{tpu_custom_call.1} parent=11 // pred_check_branch
          %176 = sbr.rel (%p174) target = $region28
        $region27: #{tpu_custom_call.1} parent=11 // pred_region
          _
        $region28: #{tpu_custom_call.1} parent=11 // pred_fallthru
          _
      $region12: #{tpu_custom_call.1} parent=5 // pred_fallthru
        _
      %p177 = scmp.lt.s32.totalorder %s14, 2
      // Predicated region
      $region29: #{tpu_custom_call.1} parent=5 // pred_check
        %p178 = pneg %p177
      $region30: #{tpu_custom_call.1} parent=5 // pred_check_branch
        %180 = sbr.rel (%p178) target = $region32
      $region31: #{tpu_custom_call.1} parent=5 // pred_region
        // Predicated region
        $region33: #{tpu_custom_call.1} parent=31 // pred_check
          %p181 = pneg %p34
        $region34: #{tpu_custom_call.1} parent=31 // pred_check_branch
          %183 = sbr.rel (%p181) target = $region36
        $region35: #{tpu_custom_call.1} parent=31 // pred_region
          %s184 = smul.u32 64, %s14
          %p185 = scmp.lt.s32.totalorder %s184, 127
          %s186 = scalar_select %p185, %s184, 127
          %s187 = smul.addr %s186, 8
          %s188 = scalar_lea.vmem %s0, %s187
          %s189 = smul.u32 64, %s14
        $region36: #{tpu_custom_call.1} parent=31 // pred_fallthru
          _
      $region32: #{tpu_custom_call.1} parent=5 // pred_fallthru
        _
      %p190 = scmp.le.s32.totalorder 1, %s14
      %p191 = scmp.lt.s32.totalorder %s14, 3
      %p192 = pnand %p190, %p191
      %p193 = pneg %p192
      // Predicated region
      $region37: #{tpu_custom_call.1} parent=5 // pred_check
        _
      $region38: #{tpu_custom_call.1} parent=5 // pred_check_branch
        %195 = sbr.rel (%p192) target = $region40
      $region39: #{tpu_custom_call.1} parent=5 // pred_region
        %s196 = ssub.s32 %s14, 1
        %s197 = smul.u32 64, %s19
        %p198 = scmp.lt.s32.totalorder %s197, 127
        %s199 = scalar_select %p198, %s197, 127
        %s200 = smul.addr %s199, 8
        %s201 = scalar_lea.vmem %s0, %s200
        %p202 = pneg %p40
        %p203 = pneg %p37
        %p204 = pneg %p61
        %p205 = pneg %p58
        %p206 = pneg %p82
        %p207 = pneg %p79
        %p208 = pneg %p103
        %p209 = pneg %p100
        %p210 = pneg %p124
        %p211 = pneg %p121
        %p212 = pneg %p150
        %p213 = pneg %p147
        %s214 = sand.u32 %s137, 1
        %s215 = scalar_lea.sflag [#allocation4], %s214
        %s216 = sand.u32 %s137, 1
        %s217 = smul.addr %s216, 24
        %s218 = scalar_lea.vmem [#allocation3], %s217
        %s219 = smul.u32 64, %s19
        %p220 = scmp.lt.s32.totalorder %s219, 127
        %s221 = scalar_select %p220, %s219, 127
        %s222 = smul.addr %s221, 8
        %s223 = scalar_lea.vmem %s0, %s222
        %s224 = smul.u32 64, %s19
        %v225 = vld [vmem:[%s1] sm:$0xf]
        %v226 = vld [vmem:[%s2] sm:$0x1]
        %v227 = vld [vmem:[%s223] sm:$0xff]
        %v228 = vld [vmem:[%s223 + $0x8] sm:$0xff]
        %v229 = vld [vmem:[%s223 + $0x10] sm:$0xff]
        %v230 = vld [vmem:[%s223 + $0x18] sm:$0xff]
        %v231 = vld [vmem:[%s223 + $0x20] sm:$0xff]
        %v232 = vld [vmem:[%s223 + $0x28] sm:$0xff]
        %v233 = vld [vmem:[%s223 + $0x30] sm:$0xff]
        %v234 = vld [vmem:[%s223 + $0x38] sm:$0xff]
        %v235 = vld [vmem:[%s223 + $0x40] sm:$0xff]
        %v236 = vld [vmem:[%s223 + $0x48] sm:$0xff]
        %v237 = vld [vmem:[%s223 + $0x50] sm:$0xff]
        %v238 = vld [vmem:[%s223 + $0x58] sm:$0xff]
        %v239 = vld [vmem:[%s223 + $0x60] sm:$0xff]
        %v240 = vld [vmem:[%s223 + $0x68] sm:$0xff]
        %v241 = vld [vmem:[%s223 + $0x70] sm:$0xff]
        %v242 = vld [vmem:[%s223 + $0x78] sm:$0xff]
        %v243 = vld [vmem:[%s223 + $0x80] sm:$0xff]
        %v244 = vld [vmem:[%s223 + $0x88] sm:$0xff]
        %v245 = vld [vmem:[%s223 + $0x90] sm:$0xff]
        %v246 = vld [vmem:[%s223 + $0x98] sm:$0xff]
        %v247 = vld [vmem:[%s223 + $0xa0] sm:$0xff]
        %v248 = vld [vmem:[%s223 + $0xa8] sm:$0xff]
        %v249 = vld [vmem:[%s223 + $0xb0] sm:$0xff]
        %v250 = vld [vmem:[%s223 + $0xb8] sm:$0xff]
        %v251 = vld [vmem:[%s223 + $0xc0] sm:$0xff]
        %v252 = vld [vmem:[%s223 + $0xc8] sm:$0xff]
        %v253 = vld [vmem:[%s223 + $0xd0] sm:$0xff]
        %v254 = vld [vmem:[%s223 + $0xd8] sm:$0xff]
        %v255 = vld [vmem:[%s223 + $0xe0] sm:$0xff]
        %v256 = vld [vmem:[%s223 + $0xe8] sm:$0xff]
        %v257 = vld [vmem:[%s223 + $0xf0] sm:$0xff]
        %v258 = vld [vmem:[%s223 + $0xf8] sm:$0xff]
        %v259 = vld [vmem:[%s223 + $0x100] sm:$0xff]
        %v260 = vld [vmem:[%s223 + $0x108] sm:$0xff]
        %v261 = vld [vmem:[%s223 + $0x110] sm:$0xff]
        %v262 = vld [vmem:[%s223 + $0x118] sm:$0xff]
        %v263 = vld [vmem:[%s223 + $0x120] sm:$0xff]
        %v264 = vld [vmem:[%s223 + $0x128] sm:$0xff]
        %v265 = vld [vmem:[%s223 + $0x130] sm:$0xff]
        %v266 = vld [vmem:[%s223 + $0x138] sm:$0xff]
        %v267 = vld [vmem:[%s223 + $0x140] sm:$0xff]
        %v268 = vld [vmem:[%s223 + $0x148] sm:$0xff]
        %v269 = vld [vmem:[%s223 + $0x150] sm:$0xff]
        %v270 = vld [vmem:[%s223 + $0x158] sm:$0xff]
        %v271 = vld [vmem:[%s223 + $0x160] sm:$0xff]
        %v272 = vld [vmem:[%s223 + $0x168] sm:$0xff]
        %v273 = vld [vmem:[%s223 + $0x170] sm:$0xff]
        %v274 = vld [vmem:[%s223 + $0x178] sm:$0xff]
        %v275 = vld [vmem:[%s223 + $0x180] sm:$0xff]
        %v276 = vld [vmem:[%s223 + $0x188] sm:$0xff]
        %v277 = vld [vmem:[%s223 + $0x190] sm:$0xff]
        %v278 = vld [vmem:[%s223 + $0x198] sm:$0xff]
        %v279 = vld [vmem:[%s223 + $0x1a0] sm:$0xff]
        %v280 = vld [vmem:[%s223 + $0x1a8] sm:$0xff]
        %v281 = vld [vmem:[%s223 + $0x1b0] sm:$0xff]
        %v282 = vld [vmem:[%s223 + $0x1b8] sm:$0xff]
        %v283 = vld [vmem:[%s223 + $0x1c0] sm:$0xff]
        %v284 = vld [vmem:[%s223 + $0x1c8] sm:$0xff]
        %v285 = vld [vmem:[%s223 + $0x1d0] sm:$0xff]
        %v286 = vld [vmem:[%s223 + $0x1d8] sm:$0xff]
        %v287 = vld [vmem:[%s223 + $0x1e0] sm:$0xff]
        %v288 = vld [vmem:[%s223 + $0x1e8] sm:$0xff]
        %v289 = vld [vmem:[%s223 + $0x1f0] sm:$0xff]
        %v290 = vld [vmem:[%s223 + $0x1f8] sm:$0xff]
        %v292 = vlaneseq
        %v293 = vshrl.u32 %v292, 7
        %v294 = vsub.s32 0, %v293
        %v295 = vrot.slane %v226, %v294
        %vm297 = vcmask 31744
        %v299 = vsel %vm297, %v227, 0
        %v302 = vsel %vm297, %v228, 0
        %v305 = vsel %vm297, %v229, 0
        %v308 = vsel %vm297, %v230, 0
        %v311 = vsel %vm297, %v231, 0
        %v314 = vsel %vm297, %v232, 0
        %v317 = vsel %vm297, %v233, 0
        %v320 = vsel %vm297, %v234, 0
        %v323 = vsel %vm297, %v235, 0
        %v326 = vsel %vm297, %v236, 0
        %v329 = vsel %vm297, %v237, 0
        %v332 = vsel %vm297, %v238, 0
        %v335 = vsel %vm297, %v239, 0
        %v338 = vsel %vm297, %v240, 0
        %v341 = vsel %vm297, %v241, 0
        %v344 = vsel %vm297, %v242, 0
        %v347 = vsel %vm297, %v243, 0
        %v350 = vsel %vm297, %v244, 0
        %v353 = vsel %vm297, %v245, 0
        %v356 = vsel %vm297, %v246, 0
        %v359 = vsel %vm297, %v247, 0
        %v362 = vsel %vm297, %v248, 0
        %v365 = vsel %vm297, %v249, 0
        %v368 = vsel %vm297, %v250, 0
        %v371 = vsel %vm297, %v251, 0
        %v374 = vsel %vm297, %v252, 0
        %v377 = vsel %vm297, %v253, 0
        %v380 = vsel %vm297, %v254, 0
        %v383 = vsel %vm297, %v255, 0
        %v386 = vsel %vm297, %v256, 0
        %v389 = vsel %vm297, %v257, 0
        %v392 = vsel %vm297, %v258, 0
        %v395 = vsel %vm297, %v259, 0
        %v398 = vsel %vm297, %v260, 0
        %v401 = vsel %vm297, %v261, 0
        %v404 = vsel %vm297, %v262, 0
        %v407 = vsel %vm297, %v263, 0
        %v410 = vsel %vm297, %v264, 0
        %v413 = vsel %vm297, %v265, 0
        %v416 = vsel %vm297, %v266, 0
        %v419 = vsel %vm297, %v267, 0
        %v422 = vsel %vm297, %v268, 0
        %v425 = vsel %vm297, %v269, 0
        %v428 = vsel %vm297, %v270, 0
        %v431 = vsel %vm297, %v271, 0
        %v434 = vsel %vm297, %v272, 0
        %v437 = vsel %vm297, %v273, 0
        %v440 = vsel %vm297, %v274, 0
        %v443 = vsel %vm297, %v275, 0
        %v446 = vsel %vm297, %v276, 0
        %v449 = vsel %vm297, %v277, 0
        %v452 = vsel %vm297, %v278, 0
        %v455 = vsel %vm297, %v279, 0
        %v458 = vsel %vm297, %v280, 0
        %v461 = vsel %vm297, %v281, 0
        %v464 = vsel %vm297, %v282, 0
        %v467 = vsel %vm297, %v283, 0
        %v470 = vsel %vm297, %v284, 0
        %v473 = vsel %vm297, %v285, 0
        %v476 = vsel %vm297, %v286, 0
        %v479 = vsel %vm297, %v287, 0
        %v482 = vsel %vm297, %v288, 0
        %v485 = vsel %vm297, %v289, 0
        %v488 = vsel %vm297, %v290, 0
        %vm490 = vcmask 1043456
        %v492 = vsel %vm490, %v225, 0
        %494 = vmatprep.subr.mxu0 0.0
        %495 = vmatpush1.msra.mxu0 %v492
        %496 = vmatprep.subr.mxu0 0.0
        %497 = vmatpush1.msra.mxu0 0.0
        %498 = vmatprep.subr.mxu0 0.0
        %499 = vmatpush1.msra.mxu0 0.0
        %500 = vmatprep.subr.mxu0 0.0
        %501 = vmatpush1.msra.mxu0 0.0
        %502 = vmatprep.subr.mxu0 0.0
        %503 = vmatpush1.msra.mxu0 0.0
        %504 = vmatprep.subr.mxu0 0.0
        %505 = vmatpush1.msra.mxu0 0.0
        %506 = vmatprep.subr.mxu0 0.0
        %507 = vmatpush1.msra.mxu0 0.0
        %508 = vmatprep.subr.mxu0 0.0
        %509 = vmatpush1.msra.mxu0 0.0
        %510 = vmatprep.subr.mxu0 0.0
        %511 = vmatpush1.msra.mxu0 0.0
        %512 = vmatprep.subr.mxu0 0.0
        %513 = vmatpush1.msra.mxu0 0.0
        %514 = vmatprep.subr.mxu0 0.0
        %515 = vmatpush1.msra.mxu0 0.0
        %516 = vmatprep.subr.mxu0 0.0
        %517 = vmatpush1.msra.mxu0 0.0
        %518 = vmatprep.subr.mxu0 0.0
        %519 = vmatpush1.msra.mxu0 0.0
        %520 = vmatprep.subr.mxu0 0.0
        %521 = vmatpush1.msra.mxu0 0.0
        %522 = vmatprep.subr.mxu0 0.0
        %523 = vmatpush1.msra.mxu0 0.0
        %524 = vmatprep.subr.mxu0 0.0
        %525 = vmatpush1.msra.mxu0 0.0
        %526 = vmatprep.subr.mxu0 0.0
        %527 = vmatpush1.msra.mxu0 0.0
        %528 = vmatprep.subr.mxu0 0.0
        %529 = vmatpush1.msra.mxu0 0.0
        %530 = vmatprep.subr.mxu0 0.0
        %531 = vmatpush1.msra.mxu0 0.0
        %532 = vmatprep.subr.mxu0 0.0
        %533 = vmatpush1.msra.mxu0 0.0
        %534 = vmatprep.subr.mxu0 0.0
        %535 = vmatpush1.msra.mxu0 0.0
        %536 = vmatprep.subr.mxu0 0.0
        %537 = vmatpush1.msra.mxu0 0.0
        %538 = vmatprep.subr.mxu0 0.0
        %539 = vmatpush1.msra.mxu0 0.0
        %540 = vmatprep.subr.mxu0 0.0
        %541 = vmatpush1.msra.mxu0 0.0
        %542 = vmatprep.subr.mxu0 0.0
        %543 = vmatpush1.msra.mxu0 0.0
        %544 = vmatprep.subr.mxu0 0.0
        %545 = vmatpush1.msra.mxu0 0.0
        %546 = vmatprep.subr.mxu0 0.0
        %547 = vmatpush1.msra.mxu0 0.0
        %548 = vmatprep.subr.mxu0 0.0
        %549 = vmatpush1.msra.mxu0 0.0
        %550 = vmatprep.subr.mxu0 0.0
        %551 = vmatpush1.msra.mxu0 0.0
        %552 = vmatprep.subr.mxu0 0.0
        %553 = vmatpush1.msra.mxu0 0.0
        %554 = vmatprep.subr.mxu0 0.0
        %555 = vmatpush1.msra.mxu0 0.0
        %556 = vmatprep.subr.mxu0 0.0
        %557 = vmatpush1.msra.mxu0 0.0
        %558 = vmatprep.mubr.f32.mxu0 0.0
        %559 = vmatmul.mubr.f32.gmra.mrb[0].mxu0 %v299
        %v560 = vpop.f32.mrb[0].mxu0
        %v561 = vadd.f32 %v295, %v560
        %v562 = vpop.f32.mrb[0].mxu0
        %563 = vmatprep.mubr.f32.mxu0 0.0
        %564 = vmatmul.mubr.f32.gmra.mrb[0].mxu0 %v302
        %v565 = vpop.f32.mrb[0].mxu0
        %v566 = vadd.f32 %v295, %v565
        %v567 = vpop.f32.mrb[0].mxu0
        %568 = vmatprep.mubr.f32.mxu0 0.0
        %569 = vmatmul.mubr.f32.gmra.mrb[0].mxu0 %v305
        %v570 = vpop.f32.mrb[0].mxu0
        %v571 = vadd.f32 %v295, %v570
        %v572 = vpop.f32.mrb[0].mxu0
        %573 = vmatprep.mubr.f32.mxu0 0.0
        %574 = vmatmul.mubr.f32.gmra.mrb[0].mxu0 %v308
        %v575 = vpop.f32.mrb[0].mxu0
        %v576 = vadd.f32 %v295, %v575
        %v577 = vpop.f32.mrb[0].mxu0
        %578 = vmatprep.mubr.f32.mxu0 0.0
        %579 = vmatmul.mubr.f32.gmra.mrb[0].mxu0 %v311
        %v580 = vpop.f32.mrb[0].mxu0
        %v581 = vadd.f32 %v295, %v580
        %v582 = vpop.f32.mrb[0].mxu0
        %583 = vmatprep.mubr.f32.mxu0 0.0
        %584 = vmatmul.mubr.f32.gmra.mrb[0].mxu0 %v314
        %v585 = vpop.f32.mrb[0].mxu0
        %v586 = vadd.f32 %v295, %v585
        %v587 = vpop.f32.mrb[0].mxu0
        %588 = vmatprep.mubr.f32.mxu0 0.0
        %589 = vmatmul.mubr.f32.gmra.mrb[0].mxu0 %v317
        %v590 = vpop.f32.mrb[0].mxu0
        %v591 = vadd.f32 %v295, %v590
        %v592 = vpop.f32.mrb[0].mxu0
        %593 = vmatprep.mubr.f32.mxu0 0.0
        %594 = vmatmul.mubr.f32.gmra.mrb[0].mxu0 %v320
        %v595 = vpop.f32.mrb[0].mxu0
        %v596 = vadd.f32 %v295, %v595
        %v597 = vpop.f32.mrb[0].mxu0
        %598 = vmatprep.mubr.f32.mxu0 0.0
        %599 = vmatmul.mubr.f32.gmra.mrb[0].mxu0 %v323
        %v600 = vpop.f32.mrb[0].mxu0
        %v601 = vadd.f32 %v295, %v600
        %v602 = vpop.f32.mrb[0].mxu0
        %603 = vmatprep.mubr.f32.mxu0 0.0
        %604 = vmatmul.mubr.f32.gmra.mrb[0].mxu0 %v326
        %v605 = vpop.f32.mrb[0].mxu0
        %v606 = vadd.f32 %v295, %v605
        %v607 = vpop.f32.mrb[0].mxu0
        %608 = vmatprep.mubr.f32.mxu0 0.0
        %609 = vmatmul.mubr.f32.gmra.mrb[0].mxu0 %v329
        %v610 = vpop.f32.mrb[0].mxu0
        %v611 = vadd.f32 %v295, %v610
        %v612 = vpop.f32.mrb[0].mxu0
        %613 = vmatprep.mubr.f32.mxu0 0.0
        %614 = vmatmul.mubr.f32.gmra.mrb[0].mxu0 %v332
        %v615 = vpop.f32.mrb[0].mxu0
        %v616 = vadd.f32 %v295, %v615
        %v617 = vpop.f32.mrb[0].mxu0
        %618 = vmatprep.mubr.f32.mxu0 0.0
        %619 = vmatmul.mubr.f32.gmra.mrb[0].mxu0 %v335
        %v620 = vpop.f32.mrb[0].mxu0
        %v621 = vadd.f32 %v295, %v620
        %v622 = vpop.f32.mrb[0].mxu0
        %623 = vmatprep.mubr.f32.mxu0 0.0
        %624 = vmatmul.mubr.f32.gmra.mrb[0].mxu0 %v338
        %v625 = vpop.f32.mrb[0].mxu0
        %v626 = vadd.f32 %v295, %v625
        %v627 = vpop.f32.mrb[0].mxu0
        %628 = vmatprep.mubr.f32.mxu0 0.0
        %629 = vmatmul.mubr.f32.gmra.mrb[0].mxu0 %v341
        %v630 = vpop.f32.mrb[0].mxu0
        %v631 = vadd.f32 %v295, %v630
        %v632 = vpop.f32.mrb[0].mxu0
        %633 = vmatprep.mubr.f32.mxu0 0.0
        %634 = vmatmul.mubr.f32.gmra.mrb[0].mxu0 %v344
        %v635 = vpop.f32.mrb[0].mxu0
        %v636 = vadd.f32 %v295, %v635
        %v637 = vpop.f32.mrb[0].mxu0
        %638 = vmatprep.mubr.f32.mxu0 0.0
        %639 = vmatmul.mubr.f32.gmra.mrb[0].mxu0 %v347
        %v640 = vpop.f32.mrb[0].mxu0
        %v641 = vadd.f32 %v295, %v640
        %v642 = vpop.f32.mrb[0].mxu0
        %643 = vmatprep.mubr.f32.mxu0 0.0
        %644 = vmatmul.mubr.f32.gmra.mrb[0].mxu0 %v350
        %v645 = vpop.f32.mrb[0].mxu0
        %v646 = vadd.f32 %v295, %v645
        %v647 = vpop.f32.mrb[0].mxu0
        %648 = vmatprep.mubr.f32.mxu0 0.0
        %649 = vmatmul.mubr.f32.gmra.mrb[0].mxu0 %v353
        %v650 = vpop.f32.mrb[0].mxu0
        %v651 = vadd.f32 %v295, %v650
        %v652 = vpop.f32.mrb[0].mxu0
        %653 = vmatprep.mubr.f32.mxu0 0.0
        %654 = vmatmul.mubr.f32.gmra.mrb[0].mxu0 %v356
        %v655 = vpop.f32.mrb[0].mxu0
        %v656 = vadd.f32 %v295, %v655
        %v657 = vpop.f32.mrb[0].mxu0
        %658 = vmatprep.mubr.f32.mxu0 0.0
        %659 = vmatmul.mubr.f32.gmra.mrb[0].mxu0 %v359
        %v660 = vpop.f32.mrb[0].mxu0
        %v661 = vadd.f32 %v295, %v660
        %v662 = vpop.f32.mrb[0].mxu0
        %663 = vmatprep.mubr.f32.mxu0 0.0
        %664 = vmatmul.mubr.f32.gmra.mrb[0].mxu0 %v362
        %v665 = vpop.f32.mrb[0].mxu0
        %v666 = vadd.f32 %v295, %v665
        %v667 = vpop.f32.mrb[0].mxu0
        %668 = vmatprep.mubr.f32.mxu0 0.0
        %669 = vmatmul.mubr.f32.gmra.mrb[0].mxu0 %v365
        %v670 = vpop.f32.mrb[0].mxu0
        %v671 = vadd.f32 %v295, %v670
        %v672 = vpop.f32.mrb[0].mxu0
        %673 = vmatprep.mubr.f32.mxu0 0.0
        %674 = vmatmul.mubr.f32.gmra.mrb[0].mxu0 %v368
        %v675 = vpop.f32.mrb[0].mxu0
        %v676 = vadd.f32 %v295, %v675
        %v677 = vpop.f32.mrb[0].mxu0
        %678 = vmatprep.mubr.f32.mxu0 0.0
        %679 = vmatmul.mubr.f32.gmra.mrb[0].mxu0 %v371
        %v680 = vpop.f32.mrb[0].mxu0
        %v681 = vadd.f32 %v295, %v680
        %v682 = vpop.f32.mrb[0].mxu0
        %683 = vmatprep.mubr.f32.mxu0 0.0
        %684 = vmatmul.mubr.f32.gmra.mrb[0].mxu0 %v374
        %v685 = vpop.f32.mrb[0].mxu0
        %v686 = vadd.f32 %v295, %v685
        %v687 = vpop.f32.mrb[0].mxu0
        %688 = vmatprep.mubr.f32.mxu0 0.0
        %689 = vmatmul.mubr.f32.gmra.mrb[0].mxu0 %v377
        %v690 = vpop.f32.mrb[0].mxu0
        %v691 = vadd.f32 %v295, %v690
        %v692 = vpop.f32.mrb[0].mxu0
        %693 = vmatprep.mubr.f32.mxu0 0.0
        %694 = vmatmul.mubr.f32.gmra.mrb[0].mxu0 %v380
        %v695 = vpop.f32.mrb[0].mxu0
        %v696 = vadd.f32 %v295, %v695
        %v697 = vpop.f32.mrb[0].mxu0
        %698 = vmatprep.mubr.f32.mxu0 0.0
        %699 = vmatmul.mubr.f32.gmra.mrb[0].mxu0 %v383
        %v700 = vpop.f32.mrb[0].mxu0
        %v701 = vadd.f32 %v295, %v700
        %v702 = vpop.f32.mrb[0].mxu0
        %703 = vmatprep.mubr.f32.mxu0 0.0
        %704 = vmatmul.mubr.f32.gmra.mrb[0].mxu0 %v386
        %v705 = vpop.f32.mrb[0].mxu0
        %v706 = vadd.f32 %v295, %v705
        %v707 = vpop.f32.mrb[0].mxu0
        %708 = vmatprep.mubr.f32.mxu0 0.0
        %709 = vmatmul.mubr.f32.gmra.mrb[0].mxu0 %v389
        %v710 = vpop.f32.mrb[0].mxu0
        %v711 = vadd.f32 %v295, %v710
        %v712 = vpop.f32.mrb[0].mxu0
        %713 = vmatprep.mubr.f32.mxu0 0.0
        %714 = vmatmul.mubr.f32.gmra.mrb[0].mxu0 %v392
        %v715 = vpop.f32.mrb[0].mxu0
        %v716 = vadd.f32 %v295, %v715
        %v717 = vpop.f32.mrb[0].mxu0
        %718 = vmatprep.mubr.f32.mxu0 0.0
        %719 = vmatmul.mubr.f32.gmra.mrb[0].mxu0 %v395
        %v720 = vpop.f32.mrb[0].mxu0
        %v721 = vadd.f32 %v295, %v720
        %v722 = vpop.f32.mrb[0].mxu0
        %723 = vmatprep.mubr.f32.mxu0 0.0
        %724 = vmatmul.mubr.f32.gmra.mrb[0].mxu0 %v398
        %v725 = vpop.f32.mrb[0].mxu0
        %v726 = vadd.f32 %v295, %v725
        %v727 = vpop.f32.mrb[0].mxu0
        %728 = vmatprep.mubr.f32.mxu0 0.0
        %729 = vmatmul.mubr.f32.gmra.mrb[0].mxu0 %v401
        %v730 = vpop.f32.mrb[0].mxu0
        %v731 = vadd.f32 %v295, %v730
        %v732 = vpop.f32.mrb[0].mxu0
        %733 = vmatprep.mubr.f32.mxu0 0.0
        %734 = vmatmul.mubr.f32.gmra.mrb[0].mxu0 %v404
        %v735 = vpop.f32.mrb[0].mxu0
        %v736 = vadd.f32 %v295, %v735
        %v737 = vpop.f32.mrb[0].mxu0
        %738 = vmatprep.mubr.f32.mxu0 0.0
        %739 = vmatmul.mubr.f32.gmra.mrb[0].mxu0 %v407
        %v740 = vpop.f32.mrb[0].mxu0
        %v741 = vadd.f32 %v295, %v740
        %v742 = vpop.f32.mrb[0].mxu0
        %743 = vmatprep.mubr.f32.mxu0 0.0
        %744 = vmatmul.mubr.f32.gmra.mrb[0].mxu0 %v410
        %v745 = vpop.f32.mrb[0].mxu0
        %v746 = vadd.f32 %v295, %v745
        %v747 = vpop.f32.mrb[0].mxu0
        %748 = vmatprep.mubr.f32.mxu0 0.0
        %749 = vmatmul.mubr.f32.gmra.mrb[0].mxu0 %v413
        %v750 = vpop.f32.mrb[0].mxu0
        %v751 = vadd.f32 %v295, %v750
        %v752 = vpop.f32.mrb[0].mxu0
        %753 = vmatprep.mubr.f32.mxu0 0.0
        %754 = vmatmul.mubr.f32.gmra.mrb[0].mxu0 %v416
        %v755 = vpop.f32.mrb[0].mxu0
        %v756 = vadd.f32 %v295, %v755
        %v757 = vpop.f32.mrb[0].mxu0
        %758 = vmatprep.mubr.f32.mxu0 0.0
        %759 = vmatmul.mubr.f32.gmra.mrb[0].mxu0 %v419
        %v760 = vpop.f32.mrb[0].mxu0
        %v761 = vadd.f32 %v295, %v760
        %v762 = vpop.f32.mrb[0].mxu0
        %763 = vmatprep.mubr.f32.mxu0 0.0
        %764 = vmatmul.mubr.f32.gmra.mrb[0].mxu0 %v422
        %v765 = vpop.f32.mrb[0].mxu0
        %v766 = vadd.f32 %v295, %v765
        %v767 = vpop.f32.mrb[0].mxu0
        %768 = vmatprep.mubr.f32.mxu0 0.0
        %769 = vmatmul.mubr.f32.gmra.mrb[0].mxu0 %v425
        %v770 = vpop.f32.mrb[0].mxu0
        %v771 = vadd.f32 %v295, %v770
        %v772 = vpop.f32.mrb[0].mxu0
        %773 = vmatprep.mubr.f32.mxu0 0.0
        %774 = vmatmul.mubr.f32.gmra.mrb[0].mxu0 %v428
        %v775 = vpop.f32.mrb[0].mxu0
        %v776 = vadd.f32 %v295, %v775
        %v777 = vpop.f32.mrb[0].mxu0
        %778 = vmatprep.mubr.f32.mxu0 0.0
        %779 = vmatmul.mubr.f32.gmra.mrb[0].mxu0 %v431
        %v780 = vpop.f32.mrb[0].mxu0
        %v781 = vadd.f32 %v295, %v780
        %v782 = vpop.f32.mrb[0].mxu0
        %783 = vmatprep.mubr.f32.mxu0 0.0
        %784 = vmatmul.mubr.f32.gmra.mrb[0].mxu0 %v434
        %v785 = vpop.f32.mrb[0].mxu0
        %v786 = vadd.f32 %v295, %v785
        %v787 = vpop.f32.mrb[0].mxu0
        %788 = vmatprep.mubr.f32.mxu0 0.0
        %789 = vmatmul.mubr.f32.gmra.mrb[0].mxu0 %v437
        %v790 = vpop.f32.mrb[0].mxu0
        %v791 = vadd.f32 %v295, %v790
        %v792 = vpop.f32.mrb[0].mxu0
        %793 = vmatprep.mubr.f32.mxu0 0.0
        %794 = vmatmul.mubr.f32.gmra.mrb[0].mxu0 %v440
        %v795 = vpop.f32.mrb[0].mxu0
        %v796 = vadd.f32 %v295, %v795
        %v797 = vpop.f32.mrb[0].mxu0
        %798 = vmatprep.mubr.f32.mxu0 0.0
        %799 = vmatmul.mubr.f32.gmra.mrb[0].mxu0 %v443
        %v800 = vpop.f32.mrb[0].mxu0
        %v801 = vadd.f32 %v295, %v800
        %v802 = vpop.f32.mrb[0].mxu0
        %803 = vmatprep.mubr.f32.mxu0 0.0
        %804 = vmatmul.mubr.f32.gmra.mrb[0].mxu0 %v446
        %v805 = vpop.f32.mrb[0].mxu0
        %v806 = vadd.f32 %v295, %v805
        %v807 = vpop.f32.mrb[0].mxu0
        %808 = vmatprep.mubr.f32.mxu0 0.0
        %809 = vmatmul.mubr.f32.gmra.mrb[0].mxu0 %v449
        %v810 = vpop.f32.mrb[0].mxu0
        %v811 = vadd.f32 %v295, %v810
        %v812 = vpop.f32.mrb[0].mxu0
        %813 = vmatprep.mubr.f32.mxu0 0.0
        %814 = vmatmul.mubr.f32.gmra.mrb[0].mxu0 %v452
        %v815 = vpop.f32.mrb[0].mxu0
        %v816 = vadd.f32 %v295, %v815
        %v817 = vpop.f32.mrb[0].mxu0
        %818 = vmatprep.mubr.f32.mxu0 0.0
        %819 = vmatmul.mubr.f32.gmra.mrb[0].mxu0 %v455
        %v820 = vpop.f32.mrb[0].mxu0
        %v821 = vadd.f32 %v295, %v820
        %v822 = vpop.f32.mrb[0].mxu0
        %823 = vmatprep.mubr.f32.mxu0 0.0
        %824 = vmatmul.mubr.f32.gmra.mrb[0].mxu0 %v458
        %v825 = vpop.f32.mrb[0].mxu0
        %v826 = vadd.f32 %v295, %v825
        %v827 = vpop.f32.mrb[0].mxu0
        %828 = vmatprep.mubr.f32.mxu0 0.0
        %829 = vmatmul.mubr.f32.gmra.mrb[0].mxu0 %v461
        %v830 = vpop.f32.mrb[0].mxu0
        %v831 = vadd.f32 %v295, %v830
        %v832 = vpop.f32.mrb[0].mxu0
        %833 = vmatprep.mubr.f32.mxu0 0.0
        %834 = vmatmul.mubr.f32.gmra.mrb[0].mxu0 %v464
        %v835 = vpop.f32.mrb[0].mxu0
        %v836 = vadd.f32 %v295, %v835
        %v837 = vpop.f32.mrb[0].mxu0
        %838 = vmatprep.mubr.f32.mxu0 0.0
        %839 = vmatmul.mubr.f32.gmra.mrb[0].mxu0 %v467
        %v840 = vpop.f32.mrb[0].mxu0
        %v841 = vadd.f32 %v295, %v840
        %v842 = vpop.f32.mrb[0].mxu0
        %843 = vmatprep.mubr.f32.mxu0 0.0
        %844 = vmatmul.mubr.f32.gmra.mrb[0].mxu0 %v470
        %v845 = vpop.f32.mrb[0].mxu0
        %v846 = vadd.f32 %v295, %v845
        %v847 = vpop.f32.mrb[0].mxu0
        %848 = vmatprep.mubr.f32.mxu0 0.0
        %849 = vmatmul.mubr.f32.gmra.mrb[0].mxu0 %v473
        %v850 = vpop.f32.mrb[0].mxu0
        %v851 = vadd.f32 %v295, %v850
        %v852 = vpop.f32.mrb[0].mxu0
        %853 = vmatprep.mubr.f32.mxu0 0.0
        %854 = vmatmul.mubr.f32.gmra.mrb[0].mxu0 %v476
        %v855 = vpop.f32.mrb[0].mxu0
        %v856 = vadd.f32 %v295, %v855
        %v857 = vpop.f32.mrb[0].mxu0
        %858 = vmatprep.mubr.f32.mxu0 0.0
        %859 = vmatmul.mubr.f32.gmra.mrb[0].mxu0 %v479
        %v860 = vpop.f32.mrb[0].mxu0
        %v861 = vadd.f32 %v295, %v860
        %v862 = vpop.f32.mrb[0].mxu0
        %863 = vmatprep.mubr.f32.mxu0 0.0
        %864 = vmatmul.mubr.f32.gmra.mrb[0].mxu0 %v482
        %v865 = vpop.f32.mrb[0].mxu0
        %v866 = vadd.f32 %v295, %v865
        %v867 = vpop.f32.mrb[0].mxu0
        %868 = vmatprep.mubr.f32.mxu0 0.0
        %869 = vmatmul.mubr.f32.gmra.mrb[0].mxu0 %v485
        %v870 = vpop.f32.mrb[0].mxu0
        %v871 = vadd.f32 %v295, %v870
        %v872 = vpop.f32.mrb[0].mxu0
        %873 = vmatprep.mubr.f32.mxu0 0.0
        %874 = vmatmul.mubr.f32.gmra.mrb[0].mxu0 %v488
        %v875 = vpop.f32.mrb[0].mxu0
        %v876 = vadd.f32 %v295, %v875
        %v877 = vpop.f32.mrb[0].mxu0
        %878 = vdwg.mxu0
        %v879 = vmax.f32 %v561, 0.0
        %v880 = vmax.f32 %v566, 0.0
        %v881 = vmax.f32 %v571, 0.0
        %v882 = vmax.f32 %v576, 0.0
        %v883 = vmax.f32 %v581, 0.0
        %v884 = vmax.f32 %v586, 0.0
        %v885 = vmax.f32 %v591, 0.0
        %v886 = vmax.f32 %v596, 0.0
        %v887 = vmax.f32 %v601, 0.0
        %v888 = vmax.f32 %v606, 0.0
        %v889 = vmax.f32 %v611, 0.0
        %v890 = vmax.f32 %v616, 0.0
        %v891 = vmax.f32 %v621, 0.0
        %v892 = vmax.f32 %v626, 0.0
        %v893 = vmax.f32 %v631, 0.0
        %v894 = vmax.f32 %v636, 0.0
        %v895 = vmax.f32 %v641, 0.0
        %v896 = vmax.f32 %v646, 0.0
        %v897 = vmax.f32 %v651, 0.0
        %v898 = vmax.f32 %v656, 0.0
        %v899 = vmax.f32 %v661, 0.0
        %v900 = vmax.f32 %v666, 0.0
        %v901 = vmax.f32 %v671, 0.0
        %v902 = vmax.f32 %v676, 0.0
        %v903 = vmax.f32 %v681, 0.0
        %v904 = vmax.f32 %v686, 0.0
        %v905 = vmax.f32 %v691, 0.0
        %v906 = vmax.f32 %v696, 0.0
        %v907 = vmax.f32 %v701, 0.0
        %v908 = vmax.f32 %v706, 0.0
        %v909 = vmax.f32 %v711, 0.0
        %v910 = vmax.f32 %v716, 0.0
        %v911 = vmax.f32 %v721, 0.0
        %v912 = vmax.f32 %v726, 0.0
        %v913 = vmax.f32 %v731, 0.0
        %v914 = vmax.f32 %v736, 0.0
        %v915 = vmax.f32 %v741, 0.0
        %v916 = vmax.f32 %v746, 0.0
        %v917 = vmax.f32 %v751, 0.0
        %v918 = vmax.f32 %v756, 0.0
        %v919 = vmax.f32 %v761, 0.0
        %v920 = vmax.f32 %v766, 0.0
        %v921 = vmax.f32 %v771, 0.0
        %v922 = vmax.f32 %v776, 0.0
        %v923 = vmax.f32 %v781, 0.0
        %v924 = vmax.f32 %v786, 0.0
        %v925 = vmax.f32 %v791, 0.0
        %v926 = vmax.f32 %v796, 0.0
        %v927 = vmax.f32 %v801, 0.0
        %v928 = vmax.f32 %v806, 0.0
        %v929 = vmax.f32 %v811, 0.0
        %v930 = vmax.f32 %v816, 0.0
        %v931 = vmax.f32 %v821, 0.0
        %v932 = vmax.f32 %v826, 0.0
        %v933 = vmax.f32 %v831, 0.0
        %v934 = vmax.f32 %v836, 0.0
        %v935 = vmax.f32 %v841, 0.0
        %v936 = vmax.f32 %v846, 0.0
        %v937 = vmax.f32 %v851, 0.0
        %v938 = vmax.f32 %v856, 0.0
        %v939 = vmax.f32 %v861, 0.0
        %v940 = vmax.f32 %v866, 0.0
        %v941 = vmax.f32 %v871, 0.0
        %v942 = vmax.f32 %v876, 0.0
        %v943 = vmax.f32 %v879, %v880
        %v944 = vmax.f32 %v943, %v881
        %v945 = vmax.f32 %v944, %v882
        %v946 = vmax.f32 %v945, %v883
        %v947 = vmax.f32 %v946, %v884
        %v948 = vmax.f32 %v947, %v885
        %v949 = vmax.f32 %v948, %v886
        %v950 = vrot.slane %v949, 4
        %v951 = vmax.f32 %v949, %v950
        %v952 = vrot.slane %v951, 2
        %v953 = vmax.f32 %v951, %v952
        %v954 = vrot.slane %v953, 1
        %v955 = vmax.f32 %v953, %v954
        %v956 = vmax.f32 %v887, %v888
        %v957 = vmax.f32 %v956, %v889
        %v958 = vmax.f32 %v957, %v890
        %v959 = vmax.f32 %v958, %v891
        %v960 = vmax.f32 %v959, %v892
        %v961 = vmax.f32 %v960, %v893
        %v962 = vmax.f32 %v961, %v894
        %v963 = vrot.slane %v962, 4
        %v964 = vmax.f32 %v962, %v963
        %v965 = vrot.slane %v964, 2
        %v966 = vmax.f32 %v964, %v965
        %v967 = vrot.slane %v966, 1
        %v968 = vmax.f32 %v966, %v967
        %v969 = vmax.f32 %v895, %v896
        %v970 = vmax.f32 %v969, %v897
        %v971 = vmax.f32 %v970, %v898
        %v972 = vmax.f32 %v971, %v899
        %v973 = vmax.f32 %v972, %v900
        %v974 = vmax.f32 %v973, %v901
        %v975 = vmax.f32 %v974, %v902
        %v976 = vrot.slane %v975, 4
        %v977 = vmax.f32 %v975, %v976
        %v978 = vrot.slane %v977, 2
        %v979 = vmax.f32 %v977, %v978
        %v980 = vrot.slane %v979, 1
        %v981 = vmax.f32 %v979, %v980
        %v982 = vmax.f32 %v903, %v904
        %v983 = vmax.f32 %v982, %v905
        %v984 = vmax.f32 %v983, %v906
        %v985 = vmax.f32 %v984, %v907
        %v986 = vmax.f32 %v985, %v908
        %v987 = vmax.f32 %v986, %v909
        %v988 = vmax.f32 %v987, %v910
        %v989 = vrot.slane %v988, 4
        %v990 = vmax.f32 %v988, %v989
        %v991 = vrot.slane %v990, 2
        %v992 = vmax.f32 %v990, %v991
        %v993 = vrot.slane %v992, 1
        %v994 = vmax.f32 %v992, %v993
        %v995 = vmax.f32 %v911, %v912
        %v996 = vmax.f32 %v995, %v913
        %v997 = vmax.f32 %v996, %v914
        %v998 = vmax.f32 %v997, %v915
        %v999 = vmax.f32 %v998, %v916
        %v1000 = vmax.f32 %v999, %v917
        %v1001 = vmax.f32 %v1000, %v918
        %v1002 = vrot.slane %v1001, 4
        %v1003 = vmax.f32 %v1001, %v1002
        %v1004 = vrot.slane %v1003, 2
        %v1005 = vmax.f32 %v1003, %v1004
        %v1006 = vrot.slane %v1005, 1
        %v1007 = vmax.f32 %v1005, %v1006
        %v1008 = vmax.f32 %v919, %v920
        %v1009 = vmax.f32 %v1008, %v921
        %v1010 = vmax.f32 %v1009, %v922
        %v1011 = vmax.f32 %v1010, %v923
        %v1012 = vmax.f32 %v1011, %v924
        %v1013 = vmax.f32 %v1012, %v925
        %v1014 = vmax.f32 %v1013, %v926
        %v1015 = vrot.slane %v1014, 4
        %v1016 = vmax.f32 %v1014, %v1015
        %v1017 = vrot.slane %v1016, 2
        %v1018 = vmax.f32 %v1016, %v1017
        %v1019 = vrot.slane %v1018, 1
        %v1020 = vmax.f32 %v1018, %v1019
        %v1021 = vmax.f32 %v927, %v928
        %v1022 = vmax.f32 %v1021, %v929
        %v1023 = vmax.f32 %v1022, %v930
        %v1024 = vmax.f32 %v1023, %v931
        %v1025 = vmax.f32 %v1024, %v932
        %v1026 = vmax.f32 %v1025, %v933
        %v1027 = vmax.f32 %v1026, %v934
        %v1028 = vrot.slane %v1027, 4
        %v1029 = vmax.f32 %v1027, %v1028
        %v1030 = vrot.slane %v1029, 2
        %v1031 = vmax.f32 %v1029, %v1030
        %v1032 = vrot.slane %v1031, 1
        %v1033 = vmax.f32 %v1031, %v1032
        %v1034 = vmax.f32 %v935, %v936
        %v1035 = vmax.f32 %v1034, %v937
        %v1036 = vmax.f32 %v1035, %v938
        %v1037 = vmax.f32 %v1036, %v939
        %v1038 = vmax.f32 %v1037, %v940
        %v1039 = vmax.f32 %v1038, %v941
        %v1040 = vmax.f32 %v1039, %v942
        %v1041 = vrot.slane %v1040, 4
        %v1042 = vmax.f32 %v1040, %v1041
        %v1043 = vrot.slane %v1042, 2
        %v1044 = vmax.f32 %v1042, %v1043
        %v1045 = vrot.slane %v1044, 1
        %v1046 = vmax.f32 %v1044, %v1045
        %vm1055 = vcmask 1041409
        %v1056 = vsel %vm1055, %v968, %v955
        %vm1057 = vcmask 1042434
        %v1058 = vsel %vm1057, %v981, %v1056
        %vm1059 = vcmask 1043459
        %v1060 = vsel %vm1059, %v994, %v1058
        %vm1061 = vcmask 1044484
        %v1062 = vsel %vm1061, %v1007, %v1060
        %vm1063 = vcmask 1045509
        %v1064 = vsel %vm1063, %v1020, %v1062
        %vm1065 = vcmask 1046534
        %v1066 = vsel %vm1065, %v1033, %v1064
        %vm1067 = vcmask 1047559
        %v1068 = vsel %vm1067, %v1046, %v1066
        %1070 = vst [vmem:[#allocation2] sm:$0xff] %v1068
        %v1071 = vld [vmem:[#allocation2] sm:$0xff]
        %v1072 = vld [vmem:[%s3] sm:$0xff]
        %v1073 = vld [vmem:[%s3 + $0x8] sm:$0xff]
        %v1074 = vld [vmem:[%s3 + $0x10] sm:$0xff]
        %v1075 = vld [vmem:[%s3 + $0x18] sm:$0xff]
        %v1076 = vld [vmem:[%s3 + $0x20] sm:$0xff]
        %v1077 = vld [vmem:[%s3 + $0x28] sm:$0xff]
        %v1078 = vld [vmem:[%s3 + $0x30] sm:$0xff]
        %v1079 = vld [vmem:[%s3 + $0x38] sm:$0xff]
        %v1080 = vld [vmem:[%s3 + $0x40] sm:$0xff]
        %v1081 = vld [vmem:[%s3 + $0x48] sm:$0xff]
        %v1082 = vld [vmem:[%s3 + $0x50] sm:$0xff]
        %v1083 = vld [vmem:[%s3 + $0x58] sm:$0xff]
        %v1084 = vld [vmem:[%s3 + $0x60] sm:$0xff]
        %v1085 = vld [vmem:[%s3 + $0x68] sm:$0xff]
        %v1086 = vld [vmem:[%s3 + $0x70] sm:$0xff]
        %v1087 = vld [vmem:[%s3 + $0x78] sm:$0xff]
        %v1088 = vld [vmem:[%s4] sm:$0x1]
        %v1090 = vlaneseq
        %v1091 = vshrl.u32 %v1090, 7
        %v1092 = vsub.s32 0, %v1091
        %v1093 = vrot.slane %v1088, %v1092
        %1095 = vmatprep.subr.mxu0 0.0
        %1096 = vmatpush1.msra.mxu0 %v1072
        %1097 = vmatprep.subr.mxu0 0.0
        %1098 = vmatpush1.msra.mxu0 %v1073
        %1099 = vmatprep.subr.mxu0 0.0
        %1100 = vmatpush1.msra.mxu0 %v1074
        %1101 = vmatprep.subr.mxu0 0.0
        %1102 = vmatpush1.msra.mxu0 %v1075
        %1103 = vmatprep.subr.mxu0 0.0
        %1104 = vmatpush1.msra.mxu0 %v1076
        %1105 = vmatprep.subr.mxu0 0.0
        %1106 = vmatpush1.msra.mxu0 %v1077
        %1107 = vmatprep.subr.mxu0 0.0
        %1108 = vmatpush1.msra.mxu0 %v1078
        %1109 = vmatprep.subr.mxu0 0.0
        %1110 = vmatpush1.msra.mxu0 %v1079
        %1111 = vmatprep.subr.mxu0 0.0
        %1112 = vmatpush1.msra.mxu0 %v1080
        %1113 = vmatprep.subr.mxu0 0.0
        %1114 = vmatpush1.msra.mxu0 %v1081
        %1115 = vmatprep.subr.mxu0 0.0
        %1116 = vmatpush1.msra.mxu0 %v1082
        %1117 = vmatprep.subr.mxu0 0.0
        %1118 = vmatpush1.msra.mxu0 %v1083
        %1119 = vmatprep.subr.mxu0 0.0
        %1120 = vmatpush1.msra.mxu0 %v1084
        %1121 = vmatprep.subr.mxu0 0.0
        %1122 = vmatpush1.msra.mxu0 %v1085
        %1123 = vmatprep.subr.mxu0 0.0
        %1124 = vmatpush1.msra.mxu0 %v1086
        %1125 = vmatprep.subr.mxu0 0.0
        %1126 = vmatpush1.msra.mxu0 %v1087
        %1127 = vmatprep.subr.mxu0 0.0
        %1128 = vmatpush1.msra.mxu0 0.0
        %1129 = vmatprep.subr.mxu0 0.0
        %1130 = vmatpush1.msra.mxu0 0.0
        %1131 = vmatprep.subr.mxu0 0.0
        %1132 = vmatpush1.msra.mxu0 0.0
        %1133 = vmatprep.subr.mxu0 0.0
        %1134 = vmatpush1.msra.mxu0 0.0
        %1135 = vmatprep.subr.mxu0 0.0
        %1136 = vmatpush1.msra.mxu0 0.0
        %1137 = vmatprep.subr.mxu0 0.0
        %1138 = vmatpush1.msra.mxu0 0.0
        %1139 = vmatprep.subr.mxu0 0.0
        %1140 = vmatpush1.msra.mxu0 0.0
        %1141 = vmatprep.subr.mxu0 0.0
        %1142 = vmatpush1.msra.mxu0 0.0
        %1143 = vmatprep.subr.mxu0 0.0
        %1144 = vmatpush1.msra.mxu0 0.0
        %1145 = vmatprep.subr.mxu0 0.0
        %1146 = vmatpush1.msra.mxu0 0.0
        %1147 = vmatprep.subr.mxu0 0.0
        %1148 = vmatpush1.msra.mxu0 0.0
        %1149 = vmatprep.subr.mxu0 0.0
        %1150 = vmatpush1.msra.mxu0 0.0
        %1151 = vmatprep.subr.mxu0 0.0
        %1152 = vmatpush1.msra.mxu0 0.0
        %1153 = vmatprep.subr.mxu0 0.0
        %1154 = vmatpush1.msra.mxu0 0.0
        %1155 = vmatprep.subr.mxu0 0.0
        %1156 = vmatpush1.msra.mxu0 0.0
        %1157 = vmatprep.subr.mxu0 0.0
        %1158 = vmatpush1.msra.mxu0 0.0
        %1159 = vmatprep.mubr.f32.mxu0 0.0
        %1160 = vmatmul.mubr.f32.gmra.mrb[0].mxu0 %v1071
        %v1161 = vpop.f32.mrb[0].mxu0
        %v1162 = vadd.f32 %v1093, %v1161
        %v1163 = vpop.f32.mrb[0].mxu0
        %1164 = vdwg.mxu0
        %v1165 = vmax.f32 %v1162, 0.0
        %v1166 = vadd.f32 %v1165, 1.0
        %1167 = vadd.xlane.f32.xlu0 %v1165
        %v1168 = vpop.xlane.xlu0 %1167
        %v1169 = vadd.f32 %v1168, 5.0
        %v1170 = vrcp.pop %v1169
        %v1171 = vmul.f32 %v1166, %v1170
        %1172 = vst [vmem:[%s218] sm:$0xff] %v1165
        %1173 = vst [vmem:[%s218 + $0x8] sm:$0xff] %v1166
        %1174 = vst [vmem:[%s218 + $0x10] sm:$0xff] %v1171
        %s1175 = sand.u32 %s137, 1
        %s1176 = scalar_lea.sflag [#allocation4], %s1175
        %s1177 = sand.u32 %s137, 1
        %s1178 = smul.addr %s1177, 24
        %s1179 = scalar_lea.vmem [#allocation3], %s1178
        // Predicated region
        $region41: #{tpu_custom_call.1} parent=39 // pred_check
          %p1180 = pneg %p147
        $region42: #{tpu_custom_call.1} parent=39 // pred_check_branch
          %1182 = sbr.rel (%p1180) target = $region44
        $region43: #{tpu_custom_call.1} parent=39 // pred_region
          %s1184 = ssub.s32 384, 384
          %1185 = vsyncadd %s1176, %s1184
          %s1186 = smul.addr %s19, 3
          %s1187 = smul.addr %s1186, 128
          %s1188 = scalar_lea.hbm %s5, %s1187
          %s1190 = sshll.u32 %s1179, 4
          %s1191 = int_to_ptr.vmem [resolvable:$true] %s1190
          %1193 = dma.vmem_to_hbm [thread:$0]  %s1191, 384, %s1188, %s1176
        $region44: #{tpu_custom_call.1} parent=39 // pred_fallthru
          _
      $region40: #{tpu_custom_call.1} parent=5 // pred_fallthru
        _
      %p1194 = scmp.le.s32.totalorder 2, %s14
      // Predicated region
      $region45: #{tpu_custom_call.1} parent=5 // pred_check
        %p1195 = pneg %p1194
      $region46: #{tpu_custom_call.1} parent=5 // pred_check_branch
        %1197 = sbr.rel (%p1195) target = $region48
      $region47: #{tpu_custom_call.1} parent=5 // pred_region
        %s1198 = ssub.s32 %s14, 2
        // Predicated region
        $region49: #{tpu_custom_call.1} parent=47 // pred_check
          %p1199 = pneg %p153
        $region50: #{tpu_custom_call.1} parent=47 // pred_check_branch
          %1201 = sbr.rel (%p1199) target = $region52
        $region51: #{tpu_custom_call.1} parent=47 // pred_region
          %s1202 = sand.u32 %s138, 1
          %s1203 = scalar_lea.sflag [#allocation4], %s1202
          %s1204 = sand.u32 %s138, 1
          %s1205 = smul.addr %s1204, 24
          %s1206 = scalar_lea.vmem [#allocation3], %s1205
          %1207 = dma.done %s1203, 384
        $region52: #{tpu_custom_call.1} parent=47 // pred_fallthru
          _
      $region48: #{tpu_custom_call.1} parent=5 // pred_fallthru
        _
    $region6: #{tpu_custom_call.1} parent=1 // loop_footer
      %s18 = sadd.s32 1, %s14
    $region7: #{tpu_custom_call.1} parent=1 // loop_footer_branch
      %13 = sbr.rel target = $region3
    $region8: #{tpu_custom_call.1} parent=1 // loop_exit
      _
    %1208 = vsyncpa [#allocation4], 1
    %s1209 = scalar_lea.sflag [#allocation4], 1
    %1210 = vsyncpa %s1209, 1

</llo_original>
